<compile_context>
chip_gen: v6e
topology: v6e:2x2x1
jax: 0.10.0
libtpu: 0.0.40
codegen_flags: <defaults>
</compile_context>

<pallas_src>
import functools
import math

import jax
import jax.numpy as jnp
from jax.experimental import pallas as pl
from jax.experimental.pallas import tpu as pltpu


def _round_up(x, m):
    return ((x + m - 1) // m) * m


def _cdiv(a, b):
    return (a + b - 1) // b


def _sublane_granule(dtype):
    # 8 rows for 4-byte dtypes, 16 for bf16/f16, 32 for int8/fp8.
    return max(8, 32 // jnp.dtype(dtype).itemsize)


@functools.lru_cache(maxsize=None)
def _chip_config():
    """(num_tensorcores, per-block byte budget, vmem_limit_bytes) for this chip."""
    num_cores = 1
    block_budget = 4 * 1024 * 1024     # safe default (v7x: 64 MiB VMEM / TC)
    vmem_limit = 32 * 1024 * 1024
    try:
        kind = jax.devices()[0].device_kind.lower()
    except Exception:
        return num_cores, block_budget, vmem_limit
    if "v7" in kind:
        num_cores = 2                  # 2 TCs per chip, keep tight VMEM budget
    else:
        if any(t in kind for t in ("v4", "v5", "v6")):
            block_budget = 8 * 1024 * 1024   # 128 MiB VMEM parts
            vmem_limit = 64 * 1024 * 1024
        if "v4" in kind:
            num_cores = 2              # megacore
    return num_cores, block_budget, vmem_limit


# ----------------------------------------------------------------------------
# Path 1: reduce the trailing (lane) axis of a [M, K] slab -> [M, 1]
# ----------------------------------------------------------------------------
def _mean_rows_kernel(x_ref, o_ref, acc_ref, *, total_k, tk, inv_k, ragged):
    k = pl.program_id(1)
    last = pl.num_programs(1) - 1
    n_chunks = tk // 128

    @pl.when(k == 0)
    def _():
        acc_ref[...] = jnp.zeros_like(acc_ref)

    def accumulate(x):
        # Lane-dense accumulation: pure VPU adds over 128-lane column chunks.
        acc = acc_ref[...]
        for j in range(n_chunks):
            acc = acc + x[:, j * 128:(j + 1) * 128]
        acc_ref[...] = acc

    if ragged:
        # Only the last K block is partial: mask it there and nowhere else.
        @pl.when(k != last)
        def _():
            accumulate(x_ref[...].astype(jnp.float32))

        @pl.when(k == last)
        def _():
            x = x_ref[...].astype(jnp.float32)
            col = jax.lax.broadcasted_iota(jnp.int32, x.shape, 1) + k * tk
            x = jnp.where(col < total_k, x, jnp.float32(0.0))
            accumulate(x)
    else:
        accumulate(x_ref[...].astype(jnp.float32))

    @pl.when(k == last)
    def _():
        # Single cross-lane (XLU) reduce, amortized over all of K.
        s = jnp.sum(acc_ref[...], axis=-1, keepdims=True)       # (tm, 1)
        o_ref[...] = (s * jnp.float32(inv_k)).astype(o_ref.dtype)


def _mean_rows(x2d, out_dtype, cfg):
    """Row-wise mean of a [M, K] array -> [M, 1] via Pallas."""
    num_cores, budget, vmem_limit = cfg
    M, K = x2d.shape
    itemsize = jnp.dtype(x2d.dtype).itemsize
    granule = _sublane_granule(x2d.dtype)

    # Lane (reduction) tile: always a multiple of 128 so the chunked
    # accumulate loop works; capped so the unrolled loop stays modest.
    tk = min(_round_up(K, 128), 2048)

    # Row (kept) tile from the per-block budget; cap at 2048 so the
    # 128-lane-padded (tm, 1) output blocks + (tm, 128) accumulator stay small.
    m_full = _round_up(M, granule)
    tm_budget = max(granule, (budget // (tk * itemsize)) // granule * granule)
    tm = min(m_full, tm_budget, 2048)

    # >=2 row blocks only when the chip actually has >1 TensorCore.
    if num_cores > 1 and M >= 2 * granule and _cdiv(M, tm) < num_cores:
        tm = max(granule, _round_up(_cdiv(M, num_cores), granule))

    grid = (_cdiv(M, tm), _cdiv(K, tk))
    ragged = (K % tk) != 0

    kernel = functools.partial(_mean_rows_kernel, total_k=K, tk=tk,
                               inv_k=1.0 / K, ragged=ragged)

    return pl.pallas_call(
        kernel,
        out_shape=jax.ShapeDtypeStruct((M, 1), out_dtype),
        grid_spec=pltpu.PrefetchScalarGridSpec(
            num_scalar_prefetch=0,
            grid=grid,
            in_specs=[pl.BlockSpec((tm, tk), lambda i, k: (i, k))],
            out_specs=pl.BlockSpec((tm, 1), lambda i, k: (i, 0)),
            scratch_shapes=[pltpu.VMEM((tm, 128), jnp.float32)],
        ),
        compiler_params=pltpu.CompilerParams(
            dimension_semantics=("parallel", "arbitrary"),
            vmem_limit_bytes=vmem_limit,
        ),
        cost_estimate=pl.CostEstimate(
            flops=M * K,
            transcendentals=0,
            bytes_accessed=M * K * itemsize + M * jnp.dtype(out_dtype).itemsize,
        ),
    )(x2d)


# ----------------------------------------------------------------------------
# Path 2: reduce the middle (sublane) axis of a [A, R, B] slab -> [A, 1, B]
# (avoids the HBM relayout a wrapper transpose would cost)
# ----------------------------------------------------------------------------
def _mean_mid_kernel(x_ref, o_ref, acc_ref, *, total_r, tr, inv_r, ragged):
    r = pl.program_id(2)
    last = pl.num_programs(2) - 1

    @pl.when(r == 0)
    def _():
        acc_ref[...] = jnp.zeros_like(acc_ref)

    def accumulate(x):
        acc_ref[...] += jnp.sum(x, axis=1, keepdims=True)       # (ta, 1, tb)

    if ragged:
        @pl.when(r != last)
        def _():
            accumulate(x_ref[...].astype(jnp.float32))

        @pl.when(r == last)
        def _():
            x = x_ref[...].astype(jnp.float32)
            row = jax.lax.broadcasted_iota(jnp.int32, x.shape, 1) + r * tr
            x = jnp.where(row < total_r, x, jnp.float32(0.0))
            accumulate(x)
    else:
        accumulate(x_ref[...].astype(jnp.float32))

    @pl.when(r == last)
    def _():
        o_ref[...] = (acc_ref[...] * jnp.float32(inv_r)).astype(o_ref.dtype)


def _mean_mid(x3d, out_dtype, cfg):
    """Mean over the middle axis of [A, R, B] -> [A, 1, B] via Pallas."""
    num_cores, budget, vmem_limit = cfg
    A, R, B = x3d.shape
    itemsize = jnp.dtype(x3d.dtype).itemsize
    granule = _sublane_granule(x3d.dtype)

    # Lane tile over the kept trailing axis (full dim if <=128, else x128).
    if B <= 128:
        tb = B
    else:
        tb = min(_round_up(B, 128), 4096)

    # Sublane tile over the reduction axis.
    r_full = _round_up(R, granule)
    tr_budget = max(granule, (budget // (tb * itemsize)) // granule * granule)
    tr = min(r_full, tr_budget)

    # Batch leading rows so each grid step moves a multi-MiB block; cap so the
    # sublane-padded accumulator / output blocks stay small in VMEM.
    ta_in = budget // max(1, tr * tb * itemsize)
    ta_acc = (2 * 1024 * 1024) // max(1, 8 * tb * 4)
    ta = max(1, min(A, ta_in, ta_acc, 1024))

    # Ensure >=2 blocks along a 'parallel' axis only on 2-TensorCore parts.
    if num_cores > 1 and _cdiv(A, ta) * _cdiv(B, tb) < num_cores:
        if A >= num_cores:
            ta = _cdiv(A, num_cores)
        elif B >= 256:
            tb = max(128, _round_up(_cdiv(B, num_cores), 128))

    grid = (_cdiv(A, ta), _cdiv(B, tb), _cdiv(R, tr))
    ragged = (R % tr) != 0

    kernel = functools.partial(_mean_mid_kernel, total_r=R, tr=tr,
                               inv_r=1.0 / R, ragged=ragged)

    return pl.pallas_call(
        kernel,
        out_shape=jax.ShapeDtypeStruct((A, 1, B), out_dtype),
        grid_spec=pltpu.PrefetchScalarGridSpec(
            num_scalar_prefetch=0,
            grid=grid,
            in_specs=[pl.BlockSpec((ta, tr, tb), lambda a, b, r: (a, r, b))],
            out_specs=pl.BlockSpec((ta, 1, tb), lambda a, b, r: (a, 0, b)),
            scratch_shapes=[pltpu.VMEM((ta, 1, tb), jnp.float32)],
        ),
        compiler_params=pltpu.CompilerParams(
            dimension_semantics=("parallel", "parallel", "arbitrary"),
            vmem_limit_bytes=vmem_limit,
        ),
        cost_estimate=pl.CostEstimate(
            flops=A * R * B,
            transcendentals=0,
            bytes_accessed=A * R * B * itemsize
            + A * B * jnp.dtype(out_dtype).itemsize,
        ),
    )(x3d)


# ----------------------------------------------------------------------------
# Module-equivalent wrapper
# ----------------------------------------------------------------------------
def deephi_mean(x, dim, keepdim):
    """JAX/Pallas equivalent of deephi_Mean.forward(input, dim, keepdim)."""
    if not jnp.issubdtype(x.dtype, jnp.floating):
        # torch.mean raises on integer tensors; match that behavior.
        raise TypeError("mean only supports floating point dtypes")

    ndim = x.ndim
    dims = (dim,) if isinstance(dim, int) else tuple(dim)
    dims = tuple(sorted(set(d % ndim for d in dims)))
    kept = tuple(d for d in range(ndim) if d not in dims)
    kept_shape = tuple(x.shape[d] for d in kept)
    red_count = math.prod(x.shape[d] for d in dims)

    if red_count == 0:
        # torch.mean over an empty extent returns NaN.
        out = jnp.full(kept_shape, jnp.nan, dtype=x.dtype)
    elif math.prod(kept_shape) == 0:
        out = jnp.zeros(kept_shape, dtype=x.dtype)
    else:
        # Split reduce dims into maximal contiguous runs and reduce them
        # back-to-front with chained Pallas kernels (no HBM transpose):
        # mean-of-means over disjoint groups equals the joint mean.
        runs = [[dims[0]]]
        for d in dims[1:]:
            if d == runs[-1][-1] + 1:
                runs[-1].append(d)
            else:
                runs.append([d])

        cfg = _chip_config()
        y = x
        for run in reversed(runs):
            d0, d1 = run[0], run[-1]
            shp = y.shape
            # f32 intermediates between chained reductions; target dtype last.
            out_dtype = x.dtype if run is runs[0] else jnp.float32
            if d1 == y.ndim - 1:
                m = math.prod(shp[:d0]) if d0 > 0 else 1
                k = math.prod(shp[d0:])
                y = _mean_rows(y.reshape(m, k), out_dtype, cfg).reshape(shp[:d0])
            else:
                a = math.prod(shp[:d0]) if d0 > 0 else 1
                r = math.prod(shp[d0:d1 + 1])
                b = math.prod(shp[d1 + 1:])
                y = _mean_mid(y.reshape(a, r, b), out_dtype, cfg).reshape(
                    shp[:d0] + shp[d1 + 1:])
        out = y  # shape == kept_shape

    if keepdim:
        out = out.reshape(tuple(1 if d in dims else x.shape[d]
                                for d in range(ndim)))
    return out


if __name__ == "__main__":
    key = jax.random.PRNGKey(0)
    x = jax.random.normal(key, (2, 4, 16, 16), dtype=jnp.float32)  # NCHW

    # torch.mean(input, dim=(2, 3), keepdim=True) — global average pooling
    out = jax.block_until_ready(deephi_mean(x, dim=(2, 3), keepdim=True))
    ref = jnp.mean(x, axis=(2, 3), keepdims=True)
    assert out.shape == ref.shape, (out.shape, ref.shape)
    assert jnp.allclose(out, ref, atol=1e-5, rtol=1e-5)

    # single middle dim, keepdim=False (no-transpose sublane-reduce path)
    out2 = jax.block_until_ready(deephi_mean(x, dim=1, keepdim=False))
    ref2 = jnp.mean(x, axis=1, keepdims=False)
    assert out2.shape == ref2.shape, (out2.shape, ref2.shape)
    assert jnp.allclose(out2, ref2, atol=1e-5, rtol=1e-5)

    # ragged shape: exercises partial blocks / last-block-only masking
    x3 = jax.random.normal(jax.random.PRNGKey(1), (3, 5, 7, 6), dtype=jnp.float32)
    out3 = jax.block_until_ready(deephi_mean(x3, dim=(2, 3), keepdim=False))
    ref3 = jnp.mean(x3, axis=(2, 3), keepdims=False)
    assert out3.shape == ref3.shape, (out3.shape, ref3.shape)
    assert jnp.allclose(out3, ref3, atol=1e-5, rtol=1e-5)

    # bf16 input: dtype-aware sublane granule (16), f32 accumulation in-kernel
    xb = x.astype(jnp.bfloat16)
    out4 = jax.block_until_ready(deephi_mean(xb, dim=(2, 3), keepdim=True))
    ref4 = jnp.mean(xb.astype(jnp.float32), axis=(2, 3), keepdims=True)
    assert out4.shape == ref4.shape, (out4.shape, ref4.shape)
    assert jnp.allclose(out4.astype(jnp.float32), ref4, atol=2e-2, rtol=2e-2)

    # non-contiguous reduce dims: chained reductions, no HBM transpose
    out5 = jax.block_until_ready(deephi_mean(x, dim=(1, 3), keepdim=True))
    ref5 = jnp.mean(x, axis=(1, 3), keepdims=True)
    assert out5.shape == ref5.shape, (out5.shape, ref5.shape)
    assert jnp.allclose(out5, ref5, atol=1e-5, rtol=1e-5)

    # full reduction to a scalar
    out6 = jax.block_until_ready(deephi_mean(x, dim=(0, 1, 2, 3), keepdim=False))
    ref6 = jnp.mean(x)
    assert out6.shape == ref6.shape, (out6.shape, ref6.shape)
    assert jnp.allclose(out6, ref6, atol=1e-5, rtol=1e-5)

    print("KERNEL_OK")
</pallas_src>

<mosaic_0001>
module attributes {stable_mosaic.version = 11 : i64} {
  func.func @_mean_rows_kernel(%arg0: i32, %arg1: i32, %arg2: memref<8x256xf32, #tpu.memory_space<vmem>>, %arg3: memref<8x1xf32, #tpu.memory_space<vmem>>, %arg4: memref<8x128xf32, #tpu.memory_space<vmem>>) attributes {dimension_semantics = [#tpu.dimension_semantics<parallel>, #tpu.dimension_semantics<arbitrary>], iteration_bounds = array<i64: 1, 1>, scalar_prefetch = 0 : i64, scratch_operands = 1 : i64, tpu.core_type = #tpu.core_type<tc>, window_params = [{transform_indices = @transform_0, window_bounds = array<i64: 8, 256>}, {transform_indices = @transform_1, window_bounds = array<i64: 8, 1>}]} {
    %c0_i32 = arith.constant 0 : i32
    %0 = arith.cmpi eq, %arg1, %c0_i32 : i32
    %1 = arith.extui %0 : i1 to i32
    %c0_i32_0 = arith.constant 0 : i32
    %2 = arith.cmpi ne, %1, %c0_i32_0 : i32
    scf.if %2 {
      %cst = arith.constant 0.000000e+00 : f32
      %13 = vector.broadcast %cst : f32 to vector<8x128xf32>
      %c0_8 = arith.constant 0 : index
      %c0_9 = arith.constant 0 : index
      %14 = vector.load %arg4[%c0_8, %c0_9] : memref<8x128xf32, #tpu.memory_space<vmem>>, vector<8x128xf32>
      tpu.vector_store %arg4[%c0_8, %c0_9], %13 {strides = array<i32>} : memref<8x128xf32, #tpu.memory_space<vmem>>, vector<8x128xf32>,
    } else {
    }
    %c0 = arith.constant 0 : index
    %c0_1 = arith.constant 0 : index
    %3 = vector.load %arg2[%c0, %c0_1] : memref<8x256xf32, #tpu.memory_space<vmem>>, vector<8x256xf32>
    %c0_2 = arith.constant 0 : index
    %c0_3 = arith.constant 0 : index
    %4 = vector.load %arg4[%c0_2, %c0_3] : memref<8x128xf32, #tpu.memory_space<vmem>>, vector<8x128xf32>
    %5 = vector.extract_strided_slice %3 {offsets = [0, 0], sizes = [8, 128], strides = [1, 1]} : vector<8x256xf32> to vector<8x128xf32>
    %6 = arith.addf %4, %5 : vector<8x128xf32>
    %7 = vector.extract_strided_slice %3 {offsets = [0, 128], sizes = [8, 128], strides = [1, 1]} : vector<8x256xf32> to vector<8x128xf32>
    %8 = arith.addf %6, %7 : vector<8x128xf32>
    %c0_4 = arith.constant 0 : index
    %c0_5 = arith.constant 0 : index
    %9 = vector.load %arg4[%c0_4, %c0_5] : memref<8x128xf32, #tpu.memory_space<vmem>>, vector<8x128xf32>
    tpu.vector_store %arg4[%c0_4, %c0_5], %8 {strides = array<i32>} : memref<8x128xf32, #tpu.memory_space<vmem>>, vector<8x128xf32>,
    %c0_i32_6 = arith.constant 0 : i32
    %10 = arith.cmpi eq, %arg1, %c0_i32_6 : i32
    %11 = arith.extui %10 : i1 to i32
    %c0_i32_7 = arith.constant 0 : i32
    %12 = arith.cmpi ne, %11, %c0_i32_7 : i32
    scf.if %12 {
      %c0_8 = arith.constant 0 : index
      %c0_9 = arith.constant 0 : index
      %13 = vector.load %arg4[%c0_8, %c0_9] : memref<8x128xf32, #tpu.memory_space<vmem>>, vector<8x128xf32>
      %cst = arith.constant dense<0.000000e+00> : vector<8xf32>
      %14 = vector.multi_reduction <add>, %13, %cst [1] : vector<8x128xf32> to vector<8xf32>
      %15 = vector.shape_cast %14 : vector<8xf32> to vector<8x1xf32>
      %cst_10 = arith.constant 3.906250e-03 : f32
      %16 = vector.broadcast %cst_10 : f32 to vector<8x1xf32>
      %17 = arith.mulf %15, %16 : vector<8x1xf32>
      %c0_11 = arith.constant 0 : index
      %c0_12 = arith.constant 0 : index
      %18 = vector.load %arg3[%c0_11, %c0_12] : memref<8x1xf32, #tpu.memory_space<vmem>>, vector<8x1xf32>
      tpu.vector_store %arg3[%c0_11, %c0_12], %17 {strides = array<i32>} : memref<8x1xf32, #tpu.memory_space<vmem>>, vector<8x1xf32>,
    } else {
    }
    return
  }
  func.func @transform_0(%arg0: i32, %arg1: i32) -> (i32, i32) {
    %c0_i32 = arith.constant 0 : i32
    return %arg0, %arg1 : i32, i32
  }
  func.func @transform_1(%arg0: i32, %arg1: i32) -> (i32, i32) {
    %c0_i32 = arith.constant 0 : i32
    %c0_i32_0 = arith.constant 0 : i32
    return %arg0, %c0_i32 : i32, i32
  }
}

</mosaic_0001>

<llo_original>
// kernel: tpu_custom_call.1
$region0: #{tpu_custom_call.1}
  #allocation0 [shape = 'u32[]', space=smem, size = 0x4, offset = 0x4, fixed_abs, tag = 'smem constant byte address 0x4 - core index']
  #allocation1 [shape = 'u32[144,128]{1,0:T(1,128)}', space=vmem, size = 0x12000, scoped, tag = 'internal scratch']
  #allocation2 [shape = 'f32[8,128]{1,0:T(8,128)}', space=vmem, size = 0x1000, scoped, tag = 'scratch operand']
  %s0 = inlined_call_operand.hbm [shape: f32[8,256], index: 0, kind: input, shape index: {}]
  %s1 = inlined_call_operand.vmem [shape: f32[8,1], index: 1, kind: output, shape index: {}]
  %s2 = sld [smem:[#allocation0]]
  $region26: #{tpu_custom_call.1} parent=0
    _
  %s4 = ssub.s32 1, %s2
  %s5 = scalar_select 0, %s4, %s2
  $region1: #{tpu_custom_call.1} parent=0
    #allocation3 [shape = 'u8[8192]{0}', space=vmem, size = 0x2000, scoped, tag = 'input window, operand 0, single buffered']
    #allocation4 [shape = 's32[1]{0}', space=sflag, size = 0x4, scoped, tag = 'scoped memory for tpu_custom_call.1']
    %6 = vsyncpa [#allocation4], 0
    // Predicated region
    $region2: #{tpu_custom_call.1} parent=1 // pred_check
      _
    $region3: #{tpu_custom_call.1} parent=1 // pred_check_branch
      %8 = sbr.rel (0) target = $region5
    $region4: #{tpu_custom_call.1} parent=1 // pred_region
      %s10 = ssub.s32 256, 256
      %11 = vsyncadd [#allocation4], %s10
      %s13 = sshll.u32 [#allocation3], 4
      %s14 = int_to_ptr.vmem [resolvable:$true] %s13
      %16 = dma.hbm_to_vmem [thread:$0]  %s0, 256, %s14, [#allocation4]
    $region5: #{tpu_custom_call.1} parent=1 // pred_fallthru
      _
    // Predicated region
    $region6: #{tpu_custom_call.1} parent=1 // pred_check
      _
    $region7: #{tpu_custom_call.1} parent=1 // pred_check_branch
      %18 = sbr.rel (0) target = $region9
    $region8: #{tpu_custom_call.1} parent=1 // pred_region
      %19 = dma.done [#allocation4], 256
    $region9: #{tpu_custom_call.1} parent=1 // pred_fallthru
      _
    %p20 = scmp.eq.s32.totalorder 0, 0
    // Predicated region
    $region10: #{tpu_custom_call.1} parent=1 // pred_check
      %p21 = pneg %p20
    $region11: #{tpu_custom_call.1} parent=1 // pred_check_branch
      %23 = sbr.rel (%p21) target = $region13
    $region12: #{tpu_custom_call.1} parent=1 // pred_region
      %24 = vst [vmem:[#allocation2] sm:$0xff] 0.0
    $region13: #{tpu_custom_call.1} parent=1 // pred_fallthru
      _
    %v25 = vld [vmem:[#allocation3] sm:$0xff]
    %v26 = vld [vmem:[#allocation3 + $0x8] sm:$0xff]
    %v27 = vld [vmem:[#allocation2] sm:$0xff]
    %v28 = vadd.f32 %v27, %v25
    %v29 = vadd.f32 %v28, %v26
    %30 = vst [vmem:[#allocation2] sm:$0xff] %v29
    // Predicated region
    $region14: #{tpu_custom_call.1} parent=1 // pred_check
      %p31 = pneg %p20
    $region15: #{tpu_custom_call.1} parent=1 // pred_check_branch
      %33 = sbr.rel (%p31) target = $region17
    $region16: #{tpu_custom_call.1} parent=1 // pred_region
      %v34 = vld [vmem:[#allocation2] sm:$0xff]
      %35 = vadd.xlane.f32.xlu0 %v34
      %v36 = vpop.xlane.xlu0 %35
      %v37 = vmul.f32 %v36, 0.00390625
      %vm38 = vcmask 7168
      %39 = vst.msk [vmem:[%s1] sm:$0xff] %vm38, %v37
    $region17: #{tpu_custom_call.1} parent=1 // pred_fallthru
      _
    // Predicated region
    $region18: #{tpu_custom_call.1} parent=1 // pred_check
      _
    $region19: #{tpu_custom_call.1} parent=1 // pred_check_branch
      %41 = sbr.rel (0) target = $region21
    $region20: #{tpu_custom_call.1} parent=1 // pred_region
      _
    $region21: #{tpu_custom_call.1} parent=1 // pred_fallthru
      _
    // Predicated region
    $region22: #{tpu_custom_call.1} parent=1 // pred_check
      _
    $region23: #{tpu_custom_call.1} parent=1 // pred_check_branch
      %43 = sbr.rel (0) target = $region25
    $region24: #{tpu_custom_call.1} parent=1 // pred_region
      _
    $region25: #{tpu_custom_call.1} parent=1 // pred_fallthru
      _
    %44 = vsyncpa [#allocation4], 1

</llo_original>
